<compile_context>
chip_gen: v5e
topology: v5e:2x2
jax: 0.10.0
libtpu: 0.0.40
codegen_flags: <defaults>
</compile_context>

<pallas_src>
import functools

import jax
import jax.numpy as jnp
from jax.experimental import pallas as pl
from jax.experimental.pallas import tpu as pltpu


def _round_up(x, m):
    return (x + m - 1) // m * m


def _vmem_capacity_bytes():
    try:
        return int(pltpu.get_tpu_info().vmem_capacity_bytes)
    except Exception:
        return 64 * 1024 * 1024  # v7x per-TC VMEM (smallest across v5e/v6e/v7x)


# ---------------------------------------------------------------------------
# fused single-pass kernel: whole (1, C, HWp) slab per batch element
# ---------------------------------------------------------------------------
def _se_fused_kernel(x_ref, w1_ref, w2_ref, o_ref, *, inv_hw):
    x = x_ref[...]                                             # (1, C, HWp), input dtype
    # channel sums with f32 accumulation; zero padding does not change the sum
    pooled = jnp.sum(x[0], axis=-1, keepdims=True,
                     dtype=jnp.float32) * inv_hw               # (C, 1)
    # fc1 -> relu : (C_red, C) @ (C, 1)   (PyTorch layout, no transpose)
    h = jnp.maximum(
        jnp.dot(w1_ref[...], pooled, preferred_element_type=jnp.float32), 0.0)
    # fc2 -> sigmoid : (C, C_red) @ (C_red, 1)
    s = jax.nn.sigmoid(
        jnp.dot(w2_ref[...], h, preferred_element_type=jnp.float32))   # (C, 1)
    # per-sublane broadcast multiply in the input dtype (x never upcast)
    o_ref[...] = x * s[None].astype(x.dtype)


# ---------------------------------------------------------------------------
# tiled two-pass kernels
# ---------------------------------------------------------------------------
def _se_pool_kernel(x_ref, w1_ref, w2_ref, scale_ref, acc_ref, *, inv_hw):
    # grid = (B, n_hw); reduction (hw) axis is last.
    hw_i = pl.program_id(1)

    @pl.when(hw_i == 0)
    def _init():
        acc_ref[...] = jnp.zeros_like(acc_ref)

    acc_ref[...] += jnp.sum(x_ref[...][0], axis=-1, keepdims=True,
                            dtype=jnp.float32)                 # (C, 1)

    @pl.when(hw_i == pl.num_programs(1) - 1)
    def _finalize():
        pooled = acc_ref[...] * inv_hw                         # (C, 1)
        h = jnp.maximum(
            jnp.dot(w1_ref[...], pooled,
                    preferred_element_type=jnp.float32), 0.0)  # (C_red, 1)
        s = jax.nn.sigmoid(
            jnp.dot(w2_ref[...], h,
                    preferred_element_type=jnp.float32))       # (C, 1)
        scale_ref[...] = s[None]                               # (1, C, 1) f32


def _se_scale_kernel(x_ref, scale_ref, o_ref):
    x = x_ref[...]                                             # (1, C, tile_hw)
    o_ref[...] = x * scale_ref[...].astype(x.dtype)            # per-sublane VPU mul


# ---------------------------------------------------------------------------
# wrapper
# ---------------------------------------------------------------------------
def se_block(x, w1, w2, *, force_tiled=False):
    """SE block forward. x: (B, C, H, W); w1: (C//r, C); w2: (C, C//r)."""
    B, C, H, W = x.shape
    HW = H * W
    c_red = w1.shape[0]
    itemsize = jnp.dtype(x.dtype).itemsize
    inv_hw = 1.0 / float(HW)

    # --- VMEM budgeting ----------------------------------------------------
    capacity = _vmem_capacity_bytes()
    vmem_limit = min(capacity * 3 // 4, 96 * 1024 * 1024)
    # per grid step: 2x (double-buffered) input block + 2x output block + headroom
    slab_budget = vmem_limit // 5

    hw_pad128 = _round_up(HW, 128)          # lane-dense last dim
    fused_slab_bytes = C * hw_pad128 * itemsize
    use_fused = (not force_tiled) and fused_slab_bytes <= slab_budget

    x_flat = x.reshape(B, C, HW)

    if use_fused:
        hw_pad = hw_pad128
        if hw_pad != HW:
            x_flat = jnp.pad(x_flat, ((0, 0), (0, 0), (0, hw_pad - HW)))
        out_flat = pl.pallas_call(
            functools.partial(_se_fused_kernel, inv_hw=inv_hw),
            out_shape=jax.ShapeDtypeStruct((B, C, hw_pad), x.dtype),
            grid_spec=pltpu.PrefetchScalarGridSpec(
                num_scalar_prefetch=0,
                grid=(B,),
                in_specs=[
                    pl.BlockSpec((1, C, hw_pad), lambda b: (b, 0, 0)),
                    pl.BlockSpec((c_red, C), lambda b: (0, 0)),
                    pl.BlockSpec((C, c_red), lambda b: (0, 0)),
                ],
                out_specs=pl.BlockSpec((1, C, hw_pad), lambda b: (b, 0, 0)),
            ),
            compiler_params=pltpu.CompilerParams(
                dimension_semantics=("parallel",),
                vmem_limit_bytes=vmem_limit),
        )(x_flat, w1, w2)
    else:
        # HW tile: 512 lanes is the measured HBM-roofline sweet spot; shrink in
        # multiples of 128 until a (C, tile_hw) block fits the per-step budget.
        tile_hw = min(512, hw_pad128)
        while C * tile_hw * itemsize > slab_budget and tile_hw > 128:
            tile_hw = max(128, (tile_hw // 2) // 128 * 128)
        hw_pad = _round_up(HW, tile_hw)
        n_hw = hw_pad // tile_hw
        if hw_pad != HW:
            x_flat = jnp.pad(x_flat, ((0, 0), (0, 0), (0, hw_pad - HW)))

        # pass 1: pooled sum -> fc1/relu -> fc2/sigmoid -> per-batch (C, 1) scale
        scale = pl.pallas_call(
            functools.partial(_se_pool_kernel, inv_hw=inv_hw),
            out_shape=jax.ShapeDtypeStruct((B, C, 1), jnp.float32),
            grid_spec=pltpu.PrefetchScalarGridSpec(
                num_scalar_prefetch=0,
                grid=(B, n_hw),
                in_specs=[
                    pl.BlockSpec((1, C, tile_hw), lambda b, k: (b, 0, k)),
                    pl.BlockSpec((c_red, C), lambda b, k: (0, 0)),
                    pl.BlockSpec((C, c_red), lambda b, k: (0, 0)),
                ],
                out_specs=pl.BlockSpec((1, C, 1), lambda b, k: (b, 0, 0)),
                scratch_shapes=[pltpu.VMEM((C, 1), jnp.float32)],
            ),
            compiler_params=pltpu.CompilerParams(
                dimension_semantics=("parallel", "arbitrary"),
                vmem_limit_bytes=vmem_limit),
        )(x_flat, w1, w2)

        # pass 2: out = x * scale  (both grid axes independent -> parallel,
        # shards across both TensorCores on v7x)
        out_flat = pl.pallas_call(
            _se_scale_kernel,
            out_shape=jax.ShapeDtypeStruct((B, C, hw_pad), x.dtype),
            grid_spec=pltpu.PrefetchScalarGridSpec(
                num_scalar_prefetch=0,
                grid=(B, n_hw),
                in_specs=[
                    pl.BlockSpec((1, C, tile_hw), lambda b, k: (b, 0, k)),
                    pl.BlockSpec((1, C, 1), lambda b, k: (b, 0, 0)),
                ],
                out_specs=pl.BlockSpec((1, C, tile_hw), lambda b, k: (b, 0, k)),
            ),
            compiler_params=pltpu.CompilerParams(
                dimension_semantics=("parallel", "parallel"),
                vmem_limit_bytes=vmem_limit),
        )(x_flat, scale)

    if hw_pad != HW:
        out_flat = out_flat[:, :, :HW]
    return out_flat.reshape(B, C, H, W)


def _reference(x, w1, w2):
    # plain-JAX reference replicating the PyTorch forward
    pooled = jnp.mean(x, axis=(2, 3))                 # (B, C)
    h = jnp.maximum(pooled @ w1.T, 0.0)               # (B, C//r)
    s = jax.nn.sigmoid(h @ w2.T)                      # (B, C)
    return x * s[:, :, None, None]


if __name__ == "__main__":
    key = jax.random.PRNGKey(0)
    kx, k1, k2, kx2 = jax.random.split(key, 4)

    B, C, reduction = 2, 32, 16
    c_red = C // reduction                            # = 2

    # deterministic parameter init (nn.Linear weight shapes: (out, in))
    w1 = jax.random.normal(k1, (c_red, C), dtype=jnp.float32) * 0.1
    w2 = jax.random.normal(k2, (C, c_red), dtype=jnp.float32) * 0.1

    # main case (128-aligned HW -> fused single-pass path)
    x = jax.random.normal(kx, (B, C, 16, 16), dtype=jnp.float32)
    out = jax.block_until_ready(se_block(x, w1, w2))
    ref = _reference(x, w1, w2)
    assert out.shape == x.shape
    assert jnp.allclose(out, ref, atol=1e-5, rtol=1e-5), "fused path mismatch"

    # non-128-aligned HW on the tiled two-pass path (exercises HW padding,
    # the HW-tile grid axis and the pl.when accumulator / finalize)
    x2 = jax.random.normal(kx2, (B, C, 23, 23), dtype=jnp.float32)
    out2 = jax.block_until_ready(se_block(x2, w1, w2, force_tiled=True))
    ref2 = _reference(x2, w1, w2)
    assert out2.shape == x2.shape
    assert jnp.allclose(out2, ref2, atol=1e-5, rtol=1e-5), "tiled path mismatch"

    print("KERNEL_OK")
</pallas_src>

<mosaic_0001>
module attributes {stable_mosaic.version = 11 : i64} {
  func.func @_se_fused_kernel(%arg0: i32, %arg1: memref<1x32x256xf32, #tpu.memory_space<vmem>>, %arg2: memref<2x32xf32, #tpu.memory_space<vmem>>, %arg3: memref<32x2xf32, #tpu.memory_space<vmem>>, %arg4: memref<1x32x256xf32, #tpu.memory_space<vmem>>) attributes {dimension_semantics = [#tpu.dimension_semantics<parallel>], iteration_bounds = array<i64: 2>, scalar_prefetch = 0 : i64, scratch_operands = 0 : i64, tpu.core_type = #tpu.core_type<tc>, window_params = [{transform_indices = @transform_0, window_bounds = array<i64: 1, 32, 256>}, {pipeline_mode = #tpu.pipeline_mode<synchronous>, transform_indices = @transform_1, window_bounds = array<i64: 2, 32>}, {pipeline_mode = #tpu.pipeline_mode<synchronous>, transform_indices = @transform_2, window_bounds = array<i64: 32, 2>}, {transform_indices = @transform_3, window_bounds = array<i64: 1, 32, 256>}]} {
    %c0 = arith.constant 0 : index
    %c0_0 = arith.constant 0 : index
    %c0_1 = arith.constant 0 : index
    %0 = vector.load %arg1[%c0, %c0_0, %c0_1] : memref<1x32x256xf32, #tpu.memory_space<vmem>>, vector<1x32x256xf32>
    %1 = vector.shape_cast %0 : vector<1x32x256xf32> to vector<32x256xf32>
    %cst = arith.constant dense<0.000000e+00> : vector<32xf32>
    %2 = vector.multi_reduction <add>, %1, %cst [1] : vector<32x256xf32> to vector<32xf32>
    %3 = vector.shape_cast %2 : vector<32xf32> to vector<32x1xf32>
    %cst_2 = arith.constant 3.906250e-03 : f32
    %4 = vector.broadcast %cst_2 : f32 to vector<32x1xf32>
    %5 = arith.mulf %3, %4 : vector<32x1xf32>
    %c0_3 = arith.constant 0 : index
    %c0_4 = arith.constant 0 : index
    %6 = vector.load %arg2[%c0_3, %c0_4] : memref<2x32xf32, #tpu.memory_space<vmem>>, vector<2x32xf32>
    %cst_5 = arith.constant dense<0.000000e+00> : vector<2x1xf32>
    %7 = tpu.matmul %6, %5, %cst_5 {dimension_numbers = #tpu.dot_dimension_numbers<[1], [0], [0], [1], [0, 0, 1, 1], [], []>} : vector<2x32xf32>, vector<32x1xf32>, vector<2x1xf32> -> vector<2x1xf32>
    %cst_6 = arith.constant 0.000000e+00 : f32
    %8 = vector.broadcast %cst_6 : f32 to vector<2x1xf32>
    %9 = arith.maximumf %7, %8 : vector<2x1xf32>
    %c0_7 = arith.constant 0 : index
    %c0_8 = arith.constant 0 : index
    %10 = vector.load %arg3[%c0_7, %c0_8] : memref<32x2xf32, #tpu.memory_space<vmem>>, vector<32x2xf32>
    %cst_9 = arith.constant dense<0.000000e+00> : vector<32x1xf32>
    %11 = tpu.matmul %10, %9, %cst_9 {dimension_numbers = #tpu.dot_dimension_numbers<[1], [0], [0], [1], [0, 0, 1, 1], [], []>} : vector<32x2xf32>, vector<2x1xf32>, vector<32x1xf32> -> vector<32x1xf32>
    %12 = arith.negf %11 : vector<32x1xf32>
    %13 = math.exp %12 : vector<32x1xf32>
    %cst_10 = arith.constant 1.000000e+00 : f32
    %14 = vector.broadcast %cst_10 : f32 to vector<32x1xf32>
    %15 = arith.addf %14, %13 : vector<32x1xf32>
    %16 = arith.divf %14, %15 : vector<32x1xf32>
    %17 = vector.shape_cast %16 : vector<32x1xf32> to vector<1x32x1xf32>
    %18 = vector.broadcast %17 : vector<1x32x1xf32> to vector<1x32x256xf32>
    %19 = arith.mulf %0, %18 : vector<1x32x256xf32>
    %c0_11 = arith.constant 0 : index
    %c0_12 = arith.constant 0 : index
    %c0_13 = arith.constant 0 : index
    %20 = vector.load %arg4[%c0_11, %c0_12, %c0_13] : memref<1x32x256xf32, #tpu.memory_space<vmem>>, vector<1x32x256xf32>
    tpu.vector_store %arg4[%c0_11, %c0_12, %c0_13], %19 {strides = array<i32>} : memref<1x32x256xf32, #tpu.memory_space<vmem>>, vector<1x32x256xf32>,
    return
  }
  func.func @transform_0(%arg0: i32) -> (i32, i32, i32) {
    %c0_i32 = arith.constant 0 : i32
    %c0_i32_0 = arith.constant 0 : i32
    %c0_i32_1 = arith.constant 0 : i32
    return %arg0, %c0_i32, %c0_i32_0 : i32, i32, i32
  }
  func.func @transform_1(%arg0: i32) -> (i32, i32) {
    %c0_i32 = arith.constant 0 : i32
    %c0_i32_0 = arith.constant 0 : i32
    %c0_i32_1 = arith.constant 0 : i32
    return %c0_i32, %c0_i32_0 : i32, i32
  }
  func.func @transform_2(%arg0: i32) -> (i32, i32) {
    %c0_i32 = arith.constant 0 : i32
    %c0_i32_0 = arith.constant 0 : i32
    %c0_i32_1 = arith.constant 0 : i32
    return %c0_i32, %c0_i32_0 : i32, i32
  }
  func.func @transform_3(%arg0: i32) -> (i32, i32, i32) {
    %c0_i32 = arith.constant 0 : i32
    %c0_i32_0 = arith.constant 0 : i32
    %c0_i32_1 = arith.constant 0 : i32
    return %arg0, %c0_i32, %c0_i32_0 : i32, i32, i32
  }
}

</mosaic_0001>

<llo_original>
// kernel: tpu_custom_call.1
$region0: #{tpu_custom_call.1}
  #allocation0 [shape = 'u32[]', space=smem, size = 0x4, offset = 0x4, fixed_abs, tag = 'smem constant byte address 0x4 - core index']
  #allocation1 [shape = 'u32[72,128]{1,0:T(1,128)}', space=vmem, size = 0x9000, scoped, tag = 'internal scratch']
  %s0 = inlined_call_operand.hbm [shape: f32[2,32,256], index: 0, kind: input, shape index: {}]
  %s1 = inlined_call_operand.vmem [shape: f32[2,32], index: 1, kind: input, shape index: {}]
  %s2 = inlined_call_operand.vmem [shape: f32[32,2], index: 2, kind: input, shape index: {}]
  %s3 = inlined_call_operand.hbm [shape: f32[2,32,256], index: 3, kind: output, shape index: {}]
  %s4 = sld [smem:[#allocation0]]
  $region49: #{tpu_custom_call.1} parent=0
    _
  %s6 = ssub.s32 1, %s4
  %s7 = scalar_select 0, %s6, %s4
  $region1: #{tpu_custom_call.1} parent=0
    #allocation2 [shape = 'u8[65536]{0}', space=vmem, size = 0x10000, scoped, tag = 'input window, operand 0']
    #allocation3 [shape = 's32[2]{0}', space=sflag, size = 0x8, scoped, tag = 'scoped memory for tpu_custom_call.1']
    #allocation4 [shape = 's32[2]{0}', space=sflag, size = 0x8, scoped, tag = 'scoped memory for tpu_custom_call.1']
    #allocation5 [shape = 'u8[65536]{0}', space=vmem, size = 0x10000, scoped, tag = 'output window, operand 0']
    %8 = vsyncpa [#allocation3], 0
    %s9 = scalar_lea.sflag [#allocation3], 1
    %10 = vsyncpa %s9, 0
    %11 = vsyncpa [#allocation4], 0
    %s12 = scalar_lea.sflag [#allocation4], 1
    %13 = vsyncpa %s12, 0
    loop: start=0, step=1, limit=4
    $region2: #{tpu_custom_call.1} parent=1 // loop_pre_header
      _
    $region3: #{tpu_custom_call.1} parent=1 // loop_header
      %s15 = sphi 0, %s19
      %p16 = scmp.ge.s32.totalorder %s15, 4
      %s25 = sphi 0, %s27
      %s28 = sphi 0, %s25
      %s29 = sphi 0, %s28
      %s45 = sphi 0, %s29
      %s49 = sphi 0, %s49
      %s51 = sphi 0, %s49
      %s52 = sphi 0, %s51
      %s66 = sphi 0, %s52
      %s70 = sphi 0, %s70
      %s72 = sphi 0, %s70
      %s73 = sphi 0, %s72
      %s87 = sphi 0, %s73
      %s93 = sphi 0, %s95
      %s96 = sphi 0, %s93
      %s97 = sphi 0, %s96
      %s113 = sphi 0, %s97
    $region4: #{tpu_custom_call.1} parent=1 // loop_header_branch
      %18 = sbr.rel (%p16) target = $region8
    $region5: #{tpu_custom_call.1} parent=1 // loop_body
      %s20 = ssub.s32 %s15, 1
      %s21 = ssub.s32 %s15, 2
      %s22 = sadd.s32 %s15, 1
      %s23 = ssub.s32 %s15, %s22
      %p24 = scmp.eq.s32.totalorder %s23, 0
      %s26 = sadd.s32 %s25, 1
      %s27 = scalar_select %p24, %s25, %s26
      %p30 = pneg %p24
      %p31 = scmp.eq.s32.totalorder %s15, 1
      %p32 = por %p30, %p31
      %p33 = scmp.ne.s32.totalorder %s25, %s28
      %p34 = scmp.eq.s32.totalorder %s15, 0
      %p35 = por %p33, %p34
      %p36 = scmp.ne.s32.totalorder %s25, %s28
      %p37 = scmp.eq.s32.totalorder %s20, 1
      %p38 = por %p36, %p37
      %p39 = scmp.ne.s32.totalorder %s28, %s29
      %p40 = scmp.eq.s32.totalorder %s20, 0
      %p41 = por %p39, %p40
      %p42 = scmp.ne.s32.totalorder %s28, %s29
      %p43 = scmp.eq.s32.totalorder %s21, 1
      %p44 = por %p42, %p43
      %p46 = scmp.ne.s32.totalorder %s29, %s45
      %p47 = scmp.eq.s32.totalorder %s21, 0
      %p48 = por %p46, %p47
      %s50 = sadd.s32 %s49, 1
      %p53 = scmp.eq.s32.totalorder %s15, 1
      %p54 = scmp.ne.s32.totalorder %s49, %s51
      %p55 = scmp.eq.s32.totalorder %s15, 0
      %p56 = por %p54, %p55
      %p57 = scmp.ne.s32.totalorder %s49, %s51
      %p58 = scmp.eq.s32.totalorder %s20, 1
      %p59 = por %p57, %p58
      %p60 = scmp.ne.s32.totalorder %s51, %s52
      %p61 = scmp.eq.s32.totalorder %s20, 0
      %p62 = por %p60, %p61
      %p63 = scmp.ne.s32.totalorder %s51, %s52
      %p64 = scmp.eq.s32.totalorder %s21, 1
      %p65 = por %p63, %p64
      %p67 = scmp.ne.s32.totalorder %s52, %s66
      %p68 = scmp.eq.s32.totalorder %s21, 0
      %p69 = por %p67, %p68
      %s71 = sadd.s32 %s70, 1
      %p74 = scmp.eq.s32.totalorder %s15, 1
      %p75 = scmp.ne.s32.totalorder %s70, %s72
      %p76 = scmp.eq.s32.totalorder %s15, 0
      %p77 = por %p75, %p76
      %p78 = scmp.ne.s32.totalorder %s70, %s72
      %p79 = scmp.eq.s32.totalorder %s20, 1
      %p80 = por %p78, %p79
      %p81 = scmp.ne.s32.totalorder %s72, %s73
      %p82 = scmp.eq.s32.totalorder %s20, 0
      %p83 = por %p81, %p82
      %p84 = scmp.ne.s32.totalorder %s72, %s73
      %p85 = scmp.eq.s32.totalorder %s21, 1
      %p86 = por %p84, %p85
      %p88 = scmp.ne.s32.totalorder %s73, %s87
      %p89 = scmp.eq.s32.totalorder %s21, 0
      %p90 = por %p88, %p89
      %s91 = ssub.s32 %s15, %s22
      %p92 = scmp.eq.s32.totalorder %s91, 0
      %s94 = sadd.s32 %s93, 1
      %s95 = scalar_select %p92, %s93, %s94
      %p98 = pneg %p92
      %p99 = scmp.eq.s32.totalorder %s15, 1
      %p100 = por %p98, %p99
      %p101 = scmp.ne.s32.totalorder %s93, %s96
      %p102 = scmp.eq.s32.totalorder %s15, 0
      %p103 = por %p101, %p102
      %p104 = scmp.ne.s32.totalorder %s93, %s96
      %p105 = scmp.eq.s32.totalorder %s20, 1
      %p106 = por %p104, %p105
      %p107 = scmp.ne.s32.totalorder %s96, %s97
      %p108 = scmp.eq.s32.totalorder %s20, 0
      %p109 = por %p107, %p108
      %p110 = scmp.ne.s32.totalorder %s96, %s97
      %p111 = scmp.eq.s32.totalorder %s21, 1
      %p112 = por %p110, %p111
      %p114 = scmp.ne.s32.totalorder %s97, %s113
      %p115 = scmp.eq.s32.totalorder %s21, 0
      %p116 = por %p114, %p115
      %p117 = scmp.le.s32.totalorder 1, %s15
      %p118 = scmp.lt.s32.totalorder %s15, 3
      %p119 = pnand %p117, %p118
      %p120 = pneg %p119
      // Predicated region
      $region9: #{tpu_custom_call.1} parent=5 // pred_check
        _
      $region10: #{tpu_custom_call.1} parent=5 // pred_check_branch
        %122 = sbr.rel (%p119) target = $region12
      $region11: #{tpu_custom_call.1} parent=5 // pred_region
        %s123 = ssub.s32 %s15, 1
        // Predicated region
        $region13: #{tpu_custom_call.1} parent=11 // pred_check
          %p124 = pneg %p62
        $region14: #{tpu_custom_call.1} parent=11 // pred_check_branch
          %126 = sbr.rel (%p124) target = $region16
        $region15: #{tpu_custom_call.1} parent=11 // pred_region
          _
        $region16: #{tpu_custom_call.1} parent=11 // pred_fallthru
          _
        // Predicated region
        $region17: #{tpu_custom_call.1} parent=11 // pred_check
          %p127 = pneg %p83
        $region18: #{tpu_custom_call.1} parent=11 // pred_check_branch
          %129 = sbr.rel (%p127) target = $region20
        $region19: #{tpu_custom_call.1} parent=11 // pred_region
          _
        $region20: #{tpu_custom_call.1} parent=11 // pred_fallthru
          _
      $region12: #{tpu_custom_call.1} parent=5 // pred_fallthru
        _
      %p130 = scmp.lt.s32.totalorder %s15, 2
      // Predicated region
      $region21: #{tpu_custom_call.1} parent=5 // pred_check
        %p131 = pneg %p130
      $region22: #{tpu_custom_call.1} parent=5 // pred_check_branch
        %133 = sbr.rel (%p131) target = $region24
      $region23: #{tpu_custom_call.1} parent=5 // pred_region
        // Predicated region
        $region25: #{tpu_custom_call.1} parent=23 // pred_check
          %p134 = pneg %p35
        $region26: #{tpu_custom_call.1} parent=23 // pred_check_branch
          %136 = sbr.rel (%p134) target = $region28
        $region27: #{tpu_custom_call.1} parent=23 // pred_region
          %s137 = sand.u32 %s25, 1
          %s138 = scalar_lea.sflag [#allocation3], %s137
          %s139 = sand.u32 %s25, 1
          %s140 = smul.addr %s139, 64
          %s141 = scalar_lea.vmem [#allocation2], %s140
          %143 = vsyncadd %s138, 0
          %s144 = smul.addr %s15, 8
          %s145 = smul.addr %s144, 8
          %s146 = scalar_lea.hbm %s0, %s145
          %s147 = sshll.u32 %s146, 4
          %s148 = int_to_ptr.hbm [resolvable:$true] %s147
          %s149 = sshll.u32 %s141, 4
          %s150 = int_to_ptr.vmem [resolvable:$true] %s149
          %155 = dma.hbm_to_vmem [thread:$0]  %s148, 1024, %s150, %s138, 256, 256, 16
        $region28: #{tpu_custom_call.1} parent=23 // pred_fallthru
          _
      $region24: #{tpu_custom_call.1} parent=5 // pred_fallthru
        _
      %p156 = scmp.le.s32.totalorder 1, %s15
      %p157 = scmp.lt.s32.totalorder %s15, 3
      %p158 = pnand %p156, %p157
      %p159 = pneg %p158
      // Predicated region
      $region29: #{tpu_custom_call.1} parent=5 // pred_check
        _
      $region30: #{tpu_custom_call.1} parent=5 // pred_check_branch
        %161 = sbr.rel (%p158) target = $region32
      $region31: #{tpu_custom_call.1} parent=5 // pred_region
        %s162 = ssub.s32 %s15, 1
        %s163 = sand.u32 %s28, 1
        %s164 = scalar_lea.sflag [#allocation3], %s163
        %s165 = sand.u32 %s28, 1
        %s166 = smul.addr %s165, 64
        %s167 = scalar_lea.vmem [#allocation2], %s166
        // Predicated region
        $region33: #{tpu_custom_call.1} parent=31 // pred_check
          %p168 = pneg %p41
        $region34: #{tpu_custom_call.1} parent=31 // pred_check_branch
          %170 = sbr.rel (%p168) target = $region36
        $region35: #{tpu_custom_call.1} parent=31 // pred_region
          %172 = dma.done %s164, 1024
        $region36: #{tpu_custom_call.1} parent=31 // pred_fallthru
          _
        %s173 = sand.u32 %s28, 1
        %s174 = scalar_lea.sflag [#allocation3], %s173
        %s175 = sand.u32 %s28, 1
        %s176 = smul.addr %s175, 64
        %s177 = scalar_lea.vmem [#allocation2], %s176
        %p178 = pneg %p41
        %p179 = pneg %p38
        %p180 = pneg %p62
        %p181 = pneg %p59
        %p182 = pneg %p83
        %p183 = pneg %p80
        %p184 = pneg %p109
        %p185 = pneg %p106
        %s186 = sand.u32 %s96, 1
        %s187 = scalar_lea.sflag [#allocation4], %s186
        %s188 = sand.u32 %s96, 1
        %s189 = smul.addr %s188, 64
        %s190 = scalar_lea.vmem [#allocation5], %s189
        %v191 = vld [vmem:[%s167] sm:$0xff]
        %v192 = vld [vmem:[%s167 + $0x8] sm:$0xff]
        %v193 = vld [vmem:[%s167 + $0x10] sm:$0xff]
        %v194 = vld [vmem:[%s167 + $0x18] sm:$0xff]
        %v195 = vld [vmem:[%s167 + $0x20] sm:$0xff]
        %v196 = vld [vmem:[%s167 + $0x28] sm:$0xff]
        %v197 = vld [vmem:[%s167 + $0x30] sm:$0xff]
        %v198 = vld [vmem:[%s167 + $0x38] sm:$0xff]
        %v199 = vadd.f32 %v191, %v192
        %200 = vadd.xlane.f32.xlu0 %v199
        %v201 = vpop.xlane.xlu0 %200
        %v202 = vadd.f32 %v193, %v194
        %203 = vadd.xlane.f32.xlu0 %v202
        %v204 = vpop.xlane.xlu0 %203
        %v205 = vadd.f32 %v195, %v196
        %206 = vadd.xlane.f32.xlu0 %v205
        %v207 = vpop.xlane.xlu0 %206
        %v208 = vadd.f32 %v197, %v198
        %209 = vadd.xlane.f32.xlu0 %v208
        %v210 = vpop.xlane.xlu0 %209
        %v211 = vmul.f32 %v201, 0.00390625
        %v212 = vmul.f32 %v204, 0.00390625
        %v213 = vmul.f32 %v207, 0.00390625
        %v214 = vmul.f32 %v210, 0.00390625
        %v215 = vld [vmem:[%s1] sm:$0x3]
        %vm216 = vcmask 261120
        %v218 = vsel %vm216, %v215, 0
        %220 = vmatpush.msra.mxu0 0.0
        %221 = vmatpush.msra.mxu0 0.0
        %222 = vmatpush.msra.mxu0 0.0
        %223 = vmatpush.msra.mxu0 0.0
        %224 = vmatpush.msra.mxu0 0.0
        %225 = vmatpush.msra.mxu0 0.0
        %226 = vmatpush.msra.mxu0 0.0
        %227 = vmatpush.msra.mxu0 0.0
        %228 = vmatpush.msra.mxu0 0.0
        %229 = vmatpush.msra.mxu0 0.0
        %230 = vmatpush.msra.mxu0 0.0
        %231 = vmatpush.msra.mxu0 0.0
        %232 = vmatpush.msra.mxu0 %v214
        %233 = vmatpush.msra.mxu0 %v213
        %234 = vmatpush.msra.mxu0 %v212
        %235 = vmatpush.msra.mxu0 %v211
        %236 = vmatmul.f32.gmra.mxu0 %v218
        %v237 = vpop.f32.mrf.mxu0
        %v238 = vadd.f32 0.0, %v237
        %239 = vdwg.mxu0
        %v240 = vmax.f32 %v238, 0.0
        %v241 = vld [vmem:[%s2] sm:$0xff]
        %v242 = vld [vmem:[%s2 + $0x8] sm:$0xff]
        %v243 = vld [vmem:[%s2 + $0x10] sm:$0xff]
        %v244 = vld [vmem:[%s2 + $0x18] sm:$0xff]
        %vm245 = vcmask 15360
        %v247 = vsel %vm245, %v241, 0
        %v250 = vsel %vm245, %v242, 0
        %v253 = vsel %vm245, %v243, 0
        %v256 = vsel %vm245, %v244, 0
        %vm258 = vcmask 1041408
        %v260 = vsel %vm258, %v240, 0
        %262 = vmatpush.msra.mxu0 0.0
        %263 = vmatpush.msra.mxu0 0.0
        %264 = vmatpush.msra.mxu0 0.0
        %265 = vmatpush.msra.mxu0 0.0
        %266 = vmatpush.msra.mxu0 0.0
        %267 = vmatpush.msra.mxu0 0.0
        %268 = vmatpush.msra.mxu0 0.0
        %269 = vmatpush.msra.mxu0 0.0
        %270 = vmatpush.msra.mxu0 0.0
        %271 = vmatpush.msra.mxu0 0.0
        %272 = vmatpush.msra.mxu0 0.0
        %273 = vmatpush.msra.mxu0 0.0
        %274 = vmatpush.msra.mxu0 0.0
        %275 = vmatpush.msra.mxu0 0.0
        %276 = vmatpush.msra.mxu0 0.0
        %277 = vmatpush.msra.mxu0 %v260
        %278 = vmatmul.f32.gmra.mxu0 %v247
        %v279 = vpop.f32.mrf.mxu0
        %v280 = vadd.f32 0.0, %v279
        %281 = vmatmul.f32.gmra.mxu0 %v250
        %v282 = vpop.f32.mrf.mxu0
        %v283 = vadd.f32 0.0, %v282
        %284 = vmatmul.f32.gmra.mxu0 %v253
        %v285 = vpop.f32.mrf.mxu0
        %v286 = vadd.f32 0.0, %v285
        %287 = vmatmul.f32.gmra.mxu0 %v256
        %v288 = vpop.f32.mrf.mxu0
        %v289 = vadd.f32 0.0, %v288
        %290 = vdwg.mxu0
        %v291 = vxor.u32 %v280, 2147483648
        %v292 = vxor.u32 %v283, 2147483648
        %v293 = vxor.u32 %v286, 2147483648
        %v294 = vxor.u32 %v289, 2147483648
        %v295 = vmul.f32 %v291, 1.442695
        %v296 = vpow.pop %v295
        %v297 = vmul.f32 %v292, 1.442695
        %v298 = vpow.pop %v297
        %v299 = vmul.f32 %v293, 1.442695
        %v300 = vpow.pop %v299
        %v301 = vmul.f32 %v294, 1.442695
        %v302 = vpow.pop %v301
        %v303 = vadd.f32 %v296, 1.0
        %v304 = vadd.f32 %v298, 1.0
        %v305 = vadd.f32 %v300, 1.0
        %v306 = vadd.f32 %v302, 1.0
        %v307 = vrcp.pop %v303
        %v308 = vmul.f32 %v303, %v307
        %v309 = vsub.f32 1.0, %v308
        %v310 = vmul.f32 %v307, %v309
        %v311 = vadd.f32 %v307, %v310
        %vm312 = vweird.f32 %v303
        %vm313 = vweird.f32 %v307
        %vm314 = vmor %vm312, %vm313
        %v315 = vsel %vm314, %v307, %v311
        %v316 = vand.u32 2147483647, %v303
        %vm317 = vcmp.eq.f32.partialorder %v316, 8.507059e+37
        %v318 = vand.u32 %v303, 2147483648
        %v319 = vor.u32 1.1754944e-38, %v318
        %v320 = vsel %vm317, %v319, %v315
        %v321 = vmul.f32 1.0, %v320
        %v322 = vrcp.pop %v304
        %v323 = vmul.f32 %v304, %v322
        %v324 = vsub.f32 1.0, %v323
        %v325 = vmul.f32 %v322, %v324
        %v326 = vadd.f32 %v322, %v325
        %vm327 = vweird.f32 %v304
        %vm328 = vweird.f32 %v322
        %vm329 = vmor %vm327, %vm328
        %v330 = vsel %vm329, %v322, %v326
        %v331 = vand.u32 2147483647, %v304
        %vm332 = vcmp.eq.f32.partialorder %v331, 8.507059e+37
        %v333 = vand.u32 %v304, 2147483648
        %v334 = vor.u32 1.1754944e-38, %v333
        %v335 = vsel %vm332, %v334, %v330
        %v336 = vmul.f32 1.0, %v335
        %v337 = vrcp.pop %v305
        %v338 = vmul.f32 %v305, %v337
        %v339 = vsub.f32 1.0, %v338
        %v340 = vmul.f32 %v337, %v339
        %v341 = vadd.f32 %v337, %v340
        %vm342 = vweird.f32 %v305
        %vm343 = vweird.f32 %v337
        %vm344 = vmor %vm342, %vm343
        %v345 = vsel %vm344, %v337, %v341
        %v346 = vand.u32 2147483647, %v305
        %vm347 = vcmp.eq.f32.partialorder %v346, 8.507059e+37
        %v348 = vand.u32 %v305, 2147483648
        %v349 = vor.u32 1.1754944e-38, %v348
        %v350 = vsel %vm347, %v349, %v345
        %v351 = vmul.f32 1.0, %v350
        %v352 = vrcp.pop %v306
        %v353 = vmul.f32 %v306, %v352
        %v354 = vsub.f32 1.0, %v353
        %v355 = vmul.f32 %v352, %v354
        %v356 = vadd.f32 %v352, %v355
        %vm357 = vweird.f32 %v306
        %vm358 = vweird.f32 %v352
        %vm359 = vmor %vm357, %vm358
        %v360 = vsel %vm359, %v352, %v356
        %v361 = vand.u32 2147483647, %v306
        %vm362 = vcmp.eq.f32.partialorder %v361, 8.507059e+37
        %v363 = vand.u32 %v306, 2147483648
        %v364 = vor.u32 1.1754944e-38, %v363
        %v365 = vsel %vm362, %v364, %v360
        %v366 = vmul.f32 1.0, %v365
        %368 = vset.pattern.permute.xlu0 0
        %369 = vperm.xlu0 %368, %v321
        %v370 = vpop.permute.xlu0 %369
        %373 = vset.pattern.permute.xlu0 0
        %374 = vperm.xlu0 %373, %v336
        %v375 = vpop.permute.xlu0 %374
        %378 = vset.pattern.permute.xlu0 0
        %379 = vperm.xlu0 %378, %v351
        %v380 = vpop.permute.xlu0 %379
        %383 = vset.pattern.permute.xlu0 0
        %384 = vperm.xlu0 %383, %v366
        %v385 = vpop.permute.xlu0 %384
        %v387 = vmul.f32 %v191, %v370
        %v388 = vmul.f32 %v192, %v370
        %v389 = vmul.f32 %v193, %v375
        %v390 = vmul.f32 %v194, %v375
        %v391 = vmul.f32 %v195, %v380
        %v392 = vmul.f32 %v196, %v380
        %v393 = vmul.f32 %v197, %v385
        %v394 = vmul.f32 %v198, %v385
        %395 = vst [vmem:[%s190] sm:$0xff] %v387
        %396 = vst [vmem:[%s190 + $0x8] sm:$0xff] %v388
        %397 = vst [vmem:[%s190 + $0x10] sm:$0xff] %v389
        %398 = vst [vmem:[%s190 + $0x18] sm:$0xff] %v390
        %399 = vst [vmem:[%s190 + $0x20] sm:$0xff] %v391
        %400 = vst [vmem:[%s190 + $0x28] sm:$0xff] %v392
        %401 = vst [vmem:[%s190 + $0x30] sm:$0xff] %v393
        %402 = vst [vmem:[%s190 + $0x38] sm:$0xff] %v394
        %s403 = sand.u32 %s96, 1
        %s404 = scalar_lea.sflag [#allocation4], %s403
        %s405 = sand.u32 %s96, 1
        %s406 = smul.addr %s405, 64
        %s407 = scalar_lea.vmem [#allocation5], %s406
        // Predicated region
        $region37: #{tpu_custom_call.1} parent=31 // pred_check
          %p408 = pneg %p106
        $region38: #{tpu_custom_call.1} parent=31 // pred_check_branch
          %410 = sbr.rel (%p408) target = $region40
        $region39: #{tpu_custom_call.1} parent=31 // pred_region
          %412 = vsyncadd %s404, 0
          %s413 = smul.addr %s20, 8
          %s414 = smul.addr %s413, 8
          %s415 = scalar_lea.hbm %s3, %s414
          %s416 = sshll.u32 %s407, 4
          %s417 = int_to_ptr.vmem [resolvable:$true] %s416
          %s418 = sshll.u32 %s415, 4
          %s419 = int_to_ptr.hbm [resolvable:$true] %s418
          %424 = dma.vmem_to_hbm [thread:$0]  %s417, 1024, %s419, %s404, 256, 256, 16
        $region40: #{tpu_custom_call.1} parent=31 // pred_fallthru
          _
      $region32: #{tpu_custom_call.1} parent=5 // pred_fallthru
        _
      %p425 = scmp.le.s32.totalorder 2, %s15
      // Predicated region
      $region41: #{tpu_custom_call.1} parent=5 // pred_check
        %p426 = pneg %p425
      $region42: #{tpu_custom_call.1} parent=5 // pred_check_branch
        %428 = sbr.rel (%p426) target = $region44
      $region43: #{tpu_custom_call.1} parent=5 // pred_region
        %s429 = ssub.s32 %s15, 2
        // Predicated region
        $region45: #{tpu_custom_call.1} parent=43 // pred_check
          %p430 = pneg %p112
        $region46: #{tpu_custom_call.1} parent=43 // pred_check_branch
          %432 = sbr.rel (%p430) target = $region48
        $region47: #{tpu_custom_call.1} parent=43 // pred_region
          %s433 = sand.u32 %s97, 1
          %s434 = scalar_lea.sflag [#allocation4], %s433
          %s435 = sand.u32 %s97, 1
          %s436 = smul.addr %s435, 64
          %s437 = scalar_lea.vmem [#allocation5], %s436
          %439 = dma.done %s434, 1024
        $region48: #{tpu_custom_call.1} parent=43 // pred_fallthru
          _
      $region44: #{tpu_custom_call.1} parent=5 // pred_fallthru
        _
    $region6: #{tpu_custom_call.1} parent=1 // loop_footer
      %s19 = sadd.s32 1, %s15
    $region7: #{tpu_custom_call.1} parent=1 // loop_footer_branch
      %14 = sbr.rel target = $region3
    $region8: #{tpu_custom_call.1} parent=1 // loop_exit
      _
    %440 = vsyncpa [#allocation3], 1
    %s441 = scalar_lea.sflag [#allocation3], 1
    %442 = vsyncpa %s441, 1
    %443 = vsyncpa [#allocation4], 1
    %s444 = scalar_lea.sflag [#allocation4], 1
    %445 = vsyncpa %s444, 1

</llo_original>
